<compile_context>
chip_gen: v7x
topology: tpu7x:2x2x1
jax: 0.10.0
libtpu: 0.0.40
codegen_flags: <defaults>
</compile_context>

<pallas_src>
import functools
import math

import jax
import jax.numpy as jnp
from jax import lax
from jax.experimental import pallas as pl
from jax.experimental.pallas import tpu as pltpu


# defaults from SuperpixelNetwork.defs
SP_TYPE = "slic"
SP_NITERS = 2
SP_M = 0.0
SP_STRIDE = 8
SP_SCALE = 1.0


def _pick_pixel_tile(n_pix, n_sp, max_tile=4096, budget_bytes=2 * 1024 * 1024):
    """Largest pixel-tile width that is a multiple of 128, divides N, and keeps
    one (S, TN) f32 tile within ~budget_bytes of VMEM."""
    if n_pix % 128 != 0:
        return n_pix                       # odd sizes: single full-width tile
    cand = (budget_bytes // (4 * max(n_sp, 1))) // 128 * 128
    t = min(n_pix, max_tile, max(128, cand))
    while n_pix % t != 0:
        t -= 128
    return t


def _slic_kernel(px_ref, mu0_ref, sims_ref, ftrs_ref, mu_sc, accf_sc, accw_sc,
                 *, scale):
    """One (batch, slic-iteration, pixel-tile) grid step of differentiable SLIC.

    px_ref:   (1, C, TN) pixel features: channels on sublanes, pixels lane-dense
    mu0_ref:  (1, S, C)  initial centroids (stride x stride average pool)
    sims_ref: (1, S, TN) soft associations (only the final iteration is written)
    ftrs_ref: (1, S, C)  final centroids
    mu_sc / accf_sc / accw_sc: (S,C)/(S,C)/(S,1) f32 scratch, persists over grid
    """
    it = pl.program_id(1)
    nt = pl.program_id(2)
    last_it = pl.num_programs(1) - 1
    last_nt = pl.num_programs(2) - 1

    # new batch element: seed centroids from the average-pool init
    @pl.when(jnp.logical_and(it == 0, nt == 0))
    def _():
        mu_sc[...] = mu0_ref[0]

    # new pass over the pixel axis: reset the centroid-update accumulators
    @pl.when(nt == 0)
    def _():
        accf_sc[...] = jnp.zeros_like(accf_sc)
        accw_sc[...] = jnp.zeros_like(accw_sc)

    px = px_ref[0]                                   # (C, TN), lane-dense
    mu = mu_sc[...]                                  # (S, C)

    # logits = -scale * ||px_p - mu_s||^2.  ||px_p||^2 is constant over s, so it
    # cancels in the softmax:  logits ≡ 2*scale*(mu @ px) - scale*||mu||^2.
    logits = jnp.dot(mu * (2.0 * scale), px,
                     preferred_element_type=jnp.float32)                 # (S, TN)
    logits = logits - scale * jnp.sum(mu * mu, axis=-1, keepdims=True)
    e = jnp.exp(logits - jnp.max(logits, axis=0, keepdims=True))
    # exact reciprocal of the (1, TN) denominator, then one (S, TN) multiply
    sims = e * (1.0 / jnp.sum(e, axis=0, keepdims=True))

    # centroid-update accumulators (contract over the pixel / lane axis)
    accf_sc[...] += lax.dot_general(sims, px, (((1,), (1,)), ((), ())),
                                    preferred_element_type=jnp.float32)  # (S, C)
    accw_sc[...] += jnp.sum(sims, axis=-1, keepdims=True)                # (S, 1)

    # only the final SLIC iteration materializes associations (its block index is
    # pinned during earlier iterations, so no intermediate HBM writeback occurs)
    @pl.when(it == last_it)
    def _():
        sims_ref[0] = sims

    # end of a pass over all pixel tiles: finish the centroid update
    @pl.when(nt == last_nt)
    def _():
        mu_sc[...] = accf_sc[...] / accw_sc[...]

    @pl.when(jnp.logical_and(it == last_it, nt == last_nt))
    def _():
        ftrs_ref[0] = mu_sc[...]


def superpixel_network_forward(x,
                               sp_stride=SP_STRIDE,
                               sp_niters=SP_NITERS,
                               sp_m=SP_M,
                               sp_scale=SP_SCALE):
    """Forward of SuperpixelNetwork (sp_type='slic', attn_type=None).

    x: (B, F, H, W) float32 (NCHW, as in PyTorch)
    returns (sims, num_spixels, ftrs, s_sims) with
      sims: (B, H, W, sH, sW) float32
      ftrs: (B, sH*sW, F+2)   float32 superpixel features
    """
    B, F, H, W = x.shape
    assert sp_niters >= 1, "sp_niters must be >= 1 for the slic path"
    assert H % sp_stride == 0 and W % sp_stride == 0, \
        "H and W must be divisible by sp_stride (reference grid init assumes this)"
    sH, sW = H // sp_stride, W // sp_stride
    S, N = sH * sW, H * W
    C = F + 2

    # ---- glue (plain JAX): lane-dense (C, N) pixel features + pooled init ----
    yy, xx = jnp.meshgrid(jnp.arange(H, dtype=jnp.float32),
                          jnp.arange(W, dtype=jnp.float32), indexing="ij")
    coords = jnp.stack([yy, xx], axis=0) * jnp.float32(math.sqrt(sp_m))   # (2,H,W)
    px_img = jnp.concatenate(
        [x.astype(jnp.float32), jnp.broadcast_to(coords[None], (B, 2, H, W))],
        axis=1)                                                           # (B,C,H,W)
    px = px_img.reshape(B, C, N)                      # pixels on the 128-lane axis

    # initial centroids = stride x stride average pool (replaces the (S,N) one-hot)
    mu0 = px_img.reshape(B, C, sH, sp_stride, sW, sp_stride).mean(axis=(3, 5))
    mu0 = mu0.reshape(B, C, S).transpose(0, 2, 1)                         # (B,S,C)

    TN = _pick_pixel_tile(N, S)
    NT = N // TN
    niters = int(sp_niters)

    def sims_index(b, it, nt):
        # Pin the block index during non-final iterations so no intermediate HBM
        # writeback is triggered; only the final iteration streams sims tiles out.
        is_last = (it == niters - 1).astype(jnp.int32)
        return (b, 0, nt * is_last)

    kernel = functools.partial(_slic_kernel, scale=float(sp_scale))
    cost = pl.CostEstimate(
        flops=int(B * niters * (4 * S * N * C + 6 * S * N)),
        transcendentals=int(B * niters * S * N),
        bytes_accessed=int(4 * (B * niters * C * N + B * S * N + 2 * B * S * C)))

    sims_flat, ftrs = pl.pallas_call(
        kernel,
        out_shape=(jax.ShapeDtypeStruct((B, S, N), jnp.float32),
                   jax.ShapeDtypeStruct((B, S, C), jnp.float32)),
        grid_spec=pltpu.PrefetchScalarGridSpec(
            num_scalar_prefetch=0,
            grid=(B, niters, NT),
            in_specs=[
                pl.BlockSpec((1, C, TN), lambda b, it, nt: (b, 0, nt)),   # px tile
                pl.BlockSpec((1, S, C), lambda b, it, nt: (b, 0, 0)),     # mu0
            ],
            out_specs=[
                pl.BlockSpec((1, S, TN), sims_index),
                pl.BlockSpec((1, S, C), lambda b, it, nt: (b, 0, 0)),
            ],
            scratch_shapes=[
                pltpu.VMEM((S, C), jnp.float32),   # running centroids
                pltpu.VMEM((S, C), jnp.float32),   # sum_p sims * px
                pltpu.VMEM((S, 1), jnp.float32),   # sum_p sims
            ],
        ),
        compiler_params=pltpu.CompilerParams(
            dimension_semantics=("parallel", "arbitrary", "arbitrary"),
            vmem_limit_bytes=32 * 1024 * 1024),
        cost_estimate=cost,
    )(px, mu0)

    # _reshape_sims: 'b (sh sw) (h w) -> b h w sh sw'
    # TODO(synk): this rearrangement is a full memory-bound pass mandated by the
    # reference output layout; drop it if downstream consumers accept (B, S, N).
    sims = sims_flat.reshape(B, sH, sW, H, W).transpose(0, 3, 4, 1, 2)

    num_spixels = S
    # TODO(synk): run_slic's sparse 9-neighbour associations (s_sims) not reproduced.
    s_sims = None
    return sims, num_spixels, ftrs, s_sims


def _slic_reference(x, sp_stride, sp_niters, sp_m, sp_scale):
    """Pure-JAX reference of the same differentiable-SLIC math (for testing)."""
    B, F, H, W = x.shape
    sH, sW = H // sp_stride, W // sp_stride
    S, N = sH * sW, H * W
    yy, xx = jnp.meshgrid(jnp.arange(H, dtype=jnp.float32),
                          jnp.arange(W, dtype=jnp.float32), indexing="ij")
    coords = jnp.stack([yy, xx], axis=0) * jnp.float32(math.sqrt(sp_m))
    px_img = jnp.concatenate(
        [x.astype(jnp.float32), jnp.broadcast_to(coords[None], (B, 2, H, W))], axis=1)
    px = px_img.reshape(B, F + 2, N)
    mu = px_img.reshape(B, F + 2, sH, sp_stride, sW, sp_stride).mean(axis=(3, 5))
    mu = mu.reshape(B, F + 2, S).transpose(0, 2, 1)
    hp = lax.Precision.HIGHEST
    sims = None
    for _ in range(int(sp_niters)):
        d = (jnp.sum(mu * mu, axis=-1)[..., None]
             + jnp.sum(px * px, axis=1)[:, None, :]
             - 2.0 * jnp.einsum("bsc,bcn->bsn", mu, px, precision=hp))
        sims = jax.nn.softmax(-sp_scale * d, axis=1)
        mu = (jnp.einsum("bsn,bcn->bsc", sims, px, precision=hp)
              / jnp.sum(sims, axis=-1)[..., None])
    return sims, mu


if __name__ == "__main__":
    key = jax.random.PRNGKey(0)
    B, F, H, W = 2, 4, 16, 16
    x = jax.random.normal(key, (B, F, H, W), dtype=jnp.float32)

    sims, num_spixels, ftrs, s_sims = superpixel_network_forward(x)
    jax.block_until_ready((sims, ftrs))

    sH = sW = H // SP_STRIDE
    S, N = sH * sW, H * W
    assert sims.shape == (B, H, W, sH, sW), sims.shape
    assert ftrs.shape == (B, S, F + 2), ftrs.shape
    assert num_spixels == S
    # associations are a softmax over superpixels -> sum to 1 per pixel
    assert jnp.allclose(sims.sum(axis=(-1, -2)), 1.0, atol=1e-5)

    # pure-JAX reference check (loose tolerance covers MXU precision modes)
    sims_ref, ftrs_ref = _slic_reference(x, SP_STRIDE, SP_NITERS, SP_M, SP_SCALE)
    sims_flat = sims.transpose(0, 3, 4, 1, 2).reshape(B, S, N)
    assert jnp.allclose(sims_flat, sims_ref, atol=2e-2), \
        float(jnp.max(jnp.abs(sims_flat - sims_ref)))
    assert jnp.allclose(ftrs, ftrs_ref, atol=2e-2), \
        float(jnp.max(jnp.abs(ftrs - ftrs_ref)))

    print("KERNEL_OK")
</pallas_src>

<mosaic_0001>
module attributes {stable_mosaic.version = 11 : i64} {
  func.func @_slic_kernel(%arg0: i32, %arg1: i32, %arg2: i32, %arg3: memref<1x6x256xf32, #tpu.memory_space<vmem>>, %arg4: memref<1x4x6xf32, #tpu.memory_space<vmem>>, %arg5: memref<1x4x256xf32, #tpu.memory_space<vmem>>, %arg6: memref<1x4x6xf32, #tpu.memory_space<vmem>>, %arg7: memref<4x6xf32, #tpu.memory_space<vmem>>, %arg8: memref<4x6xf32, #tpu.memory_space<vmem>>, %arg9: memref<4x1xf32, #tpu.memory_space<vmem>>) attributes {dimension_semantics = [#tpu.dimension_semantics<parallel>, #tpu.dimension_semantics<arbitrary>, #tpu.dimension_semantics<arbitrary>], iteration_bounds = array<i64: 2, 2, 1>, scalar_prefetch = 0 : i64, scratch_operands = 3 : i64, tpu.core_type = #tpu.core_type<tc>, window_params = [{transform_indices = @transform_0, window_bounds = array<i64: 1, 6, 256>}, {transform_indices = @transform_1, window_bounds = array<i64: 1, 4, 6>}, {transform_indices = @transform_2, window_bounds = array<i64: 1, 4, 256>}, {transform_indices = @transform_3, window_bounds = array<i64: 1, 4, 6>}]} {
    %c0_i32 = arith.constant 0 : i32
    %0 = arith.cmpi eq, %arg1, %c0_i32 : i32
    %c0_i32_0 = arith.constant 0 : i32
    %1 = arith.cmpi eq, %arg2, %c0_i32_0 : i32
    %2 = arith.andi %0, %1 : i1
    %3 = arith.extui %2 : i1 to i32
    %c0_i32_1 = arith.constant 0 : i32
    %4 = arith.cmpi ne, %3, %c0_i32_1 : i32
    scf.if %4 {
      %c0_30 = arith.constant 0 : index
      %c0_31 = arith.constant 0 : index
      %c0_32 = arith.constant 0 : index
      %52 = vector.load %arg4[%c0_30, %c0_31, %c0_32] : memref<1x4x6xf32, #tpu.memory_space<vmem>>, vector<1x4x6xf32>
      %53 = vector.shape_cast %52 : vector<1x4x6xf32> to vector<4x6xf32>
      %c0_33 = arith.constant 0 : index
      %c0_34 = arith.constant 0 : index
      %54 = vector.load %arg7[%c0_33, %c0_34] : memref<4x6xf32, #tpu.memory_space<vmem>>, vector<4x6xf32>
      tpu.vector_store %arg7[%c0_33, %c0_34], %53 {strides = array<i32>} : memref<4x6xf32, #tpu.memory_space<vmem>>, vector<4x6xf32>,
    } else {
    }
    %c0_i32_2 = arith.constant 0 : i32
    %5 = arith.cmpi eq, %arg2, %c0_i32_2 : i32
    %6 = arith.extui %5 : i1 to i32
    %c0_i32_3 = arith.constant 0 : i32
    %7 = arith.cmpi ne, %6, %c0_i32_3 : i32
    scf.if %7 {
      %cst_30 = arith.constant 0.000000e+00 : f32
      %52 = vector.broadcast %cst_30 : f32 to vector<4x6xf32>
      %c0_31 = arith.constant 0 : index
      %c0_32 = arith.constant 0 : index
      %53 = vector.load %arg8[%c0_31, %c0_32] : memref<4x6xf32, #tpu.memory_space<vmem>>, vector<4x6xf32>
      tpu.vector_store %arg8[%c0_31, %c0_32], %52 {strides = array<i32>} : memref<4x6xf32, #tpu.memory_space<vmem>>, vector<4x6xf32>,
      %cst_33 = arith.constant 0.000000e+00 : f32
      %54 = vector.broadcast %cst_33 : f32 to vector<4x1xf32>
      %c0_34 = arith.constant 0 : index
      %c0_35 = arith.constant 0 : index
      %55 = vector.load %arg9[%c0_34, %c0_35] : memref<4x1xf32, #tpu.memory_space<vmem>>, vector<4x1xf32>
      tpu.vector_store %arg9[%c0_34, %c0_35], %54 {strides = array<i32>} : memref<4x1xf32, #tpu.memory_space<vmem>>, vector<4x1xf32>,
    } else {
    }
    %c0 = arith.constant 0 : index
    %c0_4 = arith.constant 0 : index
    %c0_5 = arith.constant 0 : index
    %8 = vector.load %arg3[%c0, %c0_4, %c0_5] : memref<1x6x256xf32, #tpu.memory_space<vmem>>, vector<1x6x256xf32>
    %9 = vector.shape_cast %8 : vector<1x6x256xf32> to vector<6x256xf32>
    %c0_6 = arith.constant 0 : index
    %c0_7 = arith.constant 0 : index
    %10 = vector.load %arg7[%c0_6, %c0_7] : memref<4x6xf32, #tpu.memory_space<vmem>>, vector<4x6xf32>
    %cst = arith.constant 2.000000e+00 : f32
    %11 = vector.broadcast %cst : f32 to vector<4x6xf32>
    %12 = arith.mulf %10, %11 : vector<4x6xf32>
    %cst_8 = arith.constant dense<0.000000e+00> : vector<4x256xf32>
    %13 = tpu.matmul %12, %9, %cst_8 {dimension_numbers = #tpu.dot_dimension_numbers<[1], [0], [0], [1], [0, 0, 1, 1], [], []>} : vector<4x6xf32>, vector<6x256xf32>, vector<4x256xf32> -> vector<4x256xf32>
    %14 = arith.mulf %10, %10 : vector<4x6xf32>
    %cst_9 = arith.constant dense<0.000000e+00> : vector<4xf32>
    %15 = vector.multi_reduction <add>, %14, %cst_9 [1] : vector<4x6xf32> to vector<4xf32>
    %16 = vector.shape_cast %15 : vector<4xf32> to vector<4x1xf32>
    %cst_10 = arith.constant 1.000000e+00 : f32
    %17 = vector.broadcast %cst_10 : f32 to vector<4x1xf32>
    %18 = arith.mulf %17, %16 : vector<4x1xf32>
    %19 = vector.broadcast %18 : vector<4x1xf32> to vector<4x256xf32>
    %20 = arith.subf %13, %19 : vector<4x256xf32>
    %cst_11 = arith.constant dense<0xFF800000> : vector<256xf32>
    %21 = vector.multi_reduction <maximumf>, %20, %cst_11 [0] : vector<4x256xf32> to vector<256xf32>
    %22 = vector.shape_cast %21 : vector<256xf32> to vector<1x256xf32>
    %23 = vector.broadcast %22 : vector<1x256xf32> to vector<4x256xf32>
    %24 = arith.subf %20, %23 : vector<4x256xf32>
    %25 = math.exp %24 : vector<4x256xf32>
    %cst_12 = arith.constant dense<0.000000e+00> : vector<256xf32>
    %26 = vector.multi_reduction <add>, %25, %cst_12 [0] : vector<4x256xf32> to vector<256xf32>
    %27 = vector.shape_cast %26 : vector<256xf32> to vector<1x256xf32>
    %cst_13 = arith.constant 1.000000e+00 : f32
    %28 = vector.broadcast %cst_13 : f32 to vector<1x256xf32>
    %29 = arith.divf %28, %27 : vector<1x256xf32>
    %30 = vector.broadcast %29 : vector<1x256xf32> to vector<4x256xf32>
    %31 = arith.mulf %25, %30 : vector<4x256xf32>
    %c0_14 = arith.constant 0 : index
    %c0_15 = arith.constant 0 : index
    %32 = vector.load %arg8[%c0_14, %c0_15] : memref<4x6xf32, #tpu.memory_space<vmem>>, vector<4x6xf32>
    %cst_16 = arith.constant dense<0.000000e+00> : vector<4x6xf32>
    %33 = tpu.matmul %31, %9, %cst_16 {dimension_numbers = #tpu.dot_dimension_numbers<[1], [1], [0], [0], [0, 0, 1, 0], [], []>} : vector<4x256xf32>, vector<6x256xf32>, vector<4x6xf32> -> vector<4x6xf32>
    %34 = arith.addf %32, %33 : vector<4x6xf32>
    %c0_17 = arith.constant 0 : index
    %c0_18 = arith.constant 0 : index
    %35 = vector.load %arg8[%c0_17, %c0_18] : memref<4x6xf32, #tpu.memory_space<vmem>>, vector<4x6xf32>
    tpu.vector_store %arg8[%c0_17, %c0_18], %34 {strides = array<i32>} : memref<4x6xf32, #tpu.memory_space<vmem>>, vector<4x6xf32>,
    %c0_19 = arith.constant 0 : index
    %c0_20 = arith.constant 0 : index
    %36 = vector.load %arg9[%c0_19, %c0_20] : memref<4x1xf32, #tpu.memory_space<vmem>>, vector<4x1xf32>
    %cst_21 = arith.constant dense<0.000000e+00> : vector<4xf32>
    %37 = vector.multi_reduction <add>, %31, %cst_21 [1] : vector<4x256xf32> to vector<4xf32>
    %38 = vector.shape_cast %37 : vector<4xf32> to vector<4x1xf32>
    %39 = arith.addf %36, %38 : vector<4x1xf32>
    %c0_22 = arith.constant 0 : index
    %c0_23 = arith.constant 0 : index
    %40 = vector.load %arg9[%c0_22, %c0_23] : memref<4x1xf32, #tpu.memory_space<vmem>>, vector<4x1xf32>
    tpu.vector_store %arg9[%c0_22, %c0_23], %39 {strides = array<i32>} : memref<4x1xf32, #tpu.memory_space<vmem>>, vector<4x1xf32>,
    %c1_i32 = arith.constant 1 : i32
    %41 = arith.cmpi eq, %arg1, %c1_i32 : i32
    %42 = arith.extui %41 : i1 to i32
    %c0_i32_24 = arith.constant 0 : i32
    %43 = arith.cmpi ne, %42, %c0_i32_24 : i32
    scf.if %43 {
      %c0_30 = arith.constant 0 : index
      %c0_31 = arith.constant 0 : index
      %c0_32 = arith.constant 0 : index
      %52 = vector.load %arg5[%c0_30, %c0_31, %c0_32] : memref<1x4x256xf32, #tpu.memory_space<vmem>>, vector<1x4x256xf32>
      %53 = vector.shape_cast %52 : vector<1x4x256xf32> to vector<4x256xf32>
      %54 = vector.shape_cast %31 : vector<4x256xf32> to vector<1x4x256xf32>
      tpu.vector_store %arg5[%c0_30, %c0_31, %c0_32], %54 {strides = array<i32>} : memref<1x4x256xf32, #tpu.memory_space<vmem>>, vector<1x4x256xf32>,
    } else {
    }
    %c0_i32_25 = arith.constant 0 : i32
    %44 = arith.cmpi eq, %arg2, %c0_i32_25 : i32
    %45 = arith.extui %44 : i1 to i32
    %c0_i32_26 = arith.constant 0 : i32
    %46 = arith.cmpi ne, %45, %c0_i32_26 : i32
    scf.if %46 {
      %c0_30 = arith.constant 0 : index
      %c0_31 = arith.constant 0 : index
      %52 = vector.load %arg8[%c0_30, %c0_31] : memref<4x6xf32, #tpu.memory_space<vmem>>, vector<4x6xf32>
      %c0_32 = arith.constant 0 : index
      %c0_33 = arith.constant 0 : index
      %53 = vector.load %arg9[%c0_32, %c0_33] : memref<4x1xf32, #tpu.memory_space<vmem>>, vector<4x1xf32>
      %54 = vector.broadcast %53 : vector<4x1xf32> to vector<4x6xf32>
      %55 = arith.divf %52, %54 : vector<4x6xf32>
      %c0_34 = arith.constant 0 : index
      %c0_35 = arith.constant 0 : index
      %56 = vector.load %arg7[%c0_34, %c0_35] : memref<4x6xf32, #tpu.memory_space<vmem>>, vector<4x6xf32>
      tpu.vector_store %arg7[%c0_34, %c0_35], %55 {strides = array<i32>} : memref<4x6xf32, #tpu.memory_space<vmem>>, vector<4x6xf32>,
    } else {
    }
    %c1_i32_27 = arith.constant 1 : i32
    %47 = arith.cmpi eq, %arg1, %c1_i32_27 : i32
    %c0_i32_28 = arith.constant 0 : i32
    %48 = arith.cmpi eq, %arg2, %c0_i32_28 : i32
    %49 = arith.andi %47, %48 : i1
    %50 = arith.extui %49 : i1 to i32
    %c0_i32_29 = arith.constant 0 : i32
    %51 = arith.cmpi ne, %50, %c0_i32_29 : i32
    scf.if %51 {
      %c0_30 = arith.constant 0 : index
      %c0_31 = arith.constant 0 : index
      %52 = vector.load %arg7[%c0_30, %c0_31] : memref<4x6xf32, #tpu.memory_space<vmem>>, vector<4x6xf32>
      %c0_32 = arith.constant 0 : index
      %c0_33 = arith.constant 0 : index
      %c0_34 = arith.constant 0 : index
      %53 = vector.load %arg6[%c0_32, %c0_33, %c0_34] : memref<1x4x6xf32, #tpu.memory_space<vmem>>, vector<1x4x6xf32>
      %54 = vector.shape_cast %53 : vector<1x4x6xf32> to vector<4x6xf32>
      %55 = vector.shape_cast %52 : vector<4x6xf32> to vector<1x4x6xf32>
      tpu.vector_store %arg6[%c0_32, %c0_33, %c0_34], %55 {strides = array<i32>} : memref<1x4x6xf32, #tpu.memory_space<vmem>>, vector<1x4x6xf32>,
    } else {
    }
    return
  }
  func.func @transform_0(%arg0: i32, %arg1: i32, %arg2: i32) -> (i32, i32, i32) {
    %c0_i32 = arith.constant 0 : i32
    %c0_i32_0 = arith.constant 0 : i32
    return %arg0, %c0_i32, %arg2 : i32, i32, i32
  }
  func.func @transform_1(%arg0: i32, %arg1: i32, %arg2: i32) -> (i32, i32, i32) {
    %c0_i32 = arith.constant 0 : i32
    %c0_i32_0 = arith.constant 0 : i32
    %c0_i32_1 = arith.constant 0 : i32
    return %arg0, %c0_i32, %c0_i32_0 : i32, i32, i32
  }
  func.func @transform_2(%arg0: i32, %arg1: i32, %arg2: i32) -> (i32, i32, i32) {
    %c1_i32 = arith.constant 1 : i32
    %0 = arith.cmpi eq, %arg1, %c1_i32 : i32
    %1 = arith.extui %0 : i1 to i32
    %2 = arith.muli %arg2, %1 : i32
    %c0_i32 = arith.constant 0 : i32
    %c0_i32_0 = arith.constant 0 : i32
    return %arg0, %c0_i32, %2 : i32, i32, i32
  }
  func.func @transform_3(%arg0: i32, %arg1: i32, %arg2: i32) -> (i32, i32, i32) {
    %c0_i32 = arith.constant 0 : i32
    %c0_i32_0 = arith.constant 0 : i32
    %c0_i32_1 = arith.constant 0 : i32
    return %arg0, %c0_i32, %c0_i32_0 : i32, i32, i32
  }
}

</mosaic_0001>

<llo_original>
// kernel: tpu_custom_call.1
$region0: #{tpu_custom_call.1}
  #allocation0 [shape = 'u32[]', space=smem, size = 0x4, offset = 0x4, fixed_abs, tag = 'smem constant byte address 0x4 - core index']
  #allocation1 [shape = 'u32[144,128]{1,0:T(1,128)}', space=vmem, size = 0x12000, scoped, tag = 'internal scratch']
  #allocation2 [shape = 'f32[4,6]{1,0:T(4,128)}', space=vmem, size = 0x800, scoped, tag = 'scratch operand']
  #allocation3 [shape = 'f32[4,6]{1,0:T(4,128)}', space=vmem, size = 0x800, scoped, tag = 'scratch operand']
  #allocation4 [shape = 'f32[4,1]{1,0:T(4,128)}', space=vmem, size = 0x800, scoped, tag = 'scratch operand']
  %s0 = inlined_call_operand.vmem [shape: f32[2,6,256], index: 0, kind: input, shape index: {}]
  %s1 = inlined_call_operand.vmem [shape: f32[2,4,6], index: 1, kind: input, shape index: {}]
  %s2 = inlined_call_operand.hbm [shape: f32[2,4,256], index: 2, kind: output, shape index: {0}]
  %s3 = inlined_call_operand.hbm [shape: f32[2,4,6], index: 3, kind: output, shape index: {1}]
  %4 = xla_tuple %s2, %s3
  %s5 = sld [smem:[#allocation0]]
  $region69: #{tpu_custom_call.1} parent=0
    _
  %s7 = ssub.s32 1, %s5
  %s8 = scalar_select 0, %s7, %s5
  $region1: #{tpu_custom_call.1} parent=0
    #allocation5 [shape = 'u8[8192]{0}', space=vmem, size = 0x2000, scoped, tag = 'output window, operand 0']
    #allocation6 [shape = 's32[2]{0}', space=sflag, size = 0x8, scoped, tag = 'scoped memory for tpu_custom_call.1']
    #allocation7 [shape = 'u8[4096]{0}', space=vmem, size = 0x1000, scoped, tag = 'output window, operand 1']
    #allocation8 [shape = 's32[2]{0}', space=sflag, size = 0x8, scoped, tag = 'scoped memory for tpu_custom_call.1']
    %9 = vsyncpa [#allocation6], 0
    %s10 = scalar_lea.sflag [#allocation6], 1
    %11 = vsyncpa %s10, 0
    %12 = vsyncpa [#allocation8], 0
    %s13 = scalar_lea.sflag [#allocation8], 1
    %14 = vsyncpa %s13, 0
    loop: start=0, step=1, limit=6
    $region2: #{tpu_custom_call.1} parent=1 // loop_pre_header
      _
    $region3: #{tpu_custom_call.1} parent=1 // loop_header
      %s16 = sphi 0, %s20
      %p17 = scmp.ge.s32.totalorder %s16, 6
      %s23 = sphi 0, %s42
      %s24 = sphi 0, %s38
      %s25 = sphi 0, %s34
      %s26 = sphi 0, %s23
      %s27 = sphi 0, %s24
      %s28 = sphi 0, %s25
      %s29 = sphi 0, %s26
      %s30 = sphi 0, %s27
      %s31 = sphi 0, %s28
      %s47 = sphi 0, %s49
      %s50 = sphi 0, %s47
      %s51 = sphi 0, %s50
      %s67 = sphi 0, %s51
      %s73 = sphi 0, %s75
      %s76 = sphi 0, %s73
      %s77 = sphi 0, %s76
      %s93 = sphi 0, %s77
      %s107 = sphi 0, %s109
      %s110 = sphi 0, %s107
      %s111 = sphi 0, %s110
      %s127 = sphi 0, %s111
      %s133 = sphi 0, %s135
      %s136 = sphi 0, %s133
      %s137 = sphi 0, %s136
      %s153 = sphi 0, %s137
    $region4: #{tpu_custom_call.1} parent=1 // loop_header_branch
      %19 = sbr.rel (%p17) target = $region8
    $region5: #{tpu_custom_call.1} parent=1 // loop_body
      %s21 = ssub.s32 %s16, 1
      %s22 = ssub.s32 %s16, 2
      %s32 = sadd.s32 1, %s25
      %p33 = scmp.ge.s32.totalorder %s32, 1
      %s34 = scalar_select %p33, 0, %s32
      %s35 = sadd.s32 1, %s24
      %s36 = scalar_select %p33, %s35, %s24
      %p37 = scmp.ge.s32.totalorder %s36, 2
      %s38 = scalar_select %p37, 0, %s36
      %s39 = sadd.s32 1, %s23
      %s40 = scalar_select %p37, %s39, %s23
      %p41 = scmp.ge.s32.totalorder %s40, 2
      %s42 = scalar_select %p41, 0, %s40
      %s43 = ssub.s32 %s23, %s42
      %s44 = ssub.s32 %s25, %s34
      %s45 = sor.u32 %s43, %s44
      %p46 = scmp.eq.s32.totalorder %s45, 0
      %s48 = sadd.s32 %s47, 1
      %s49 = scalar_select %p46, %s47, %s48
      %p52 = pneg %p46
      %p53 = scmp.eq.s32.totalorder %s16, 3
      %p54 = por %p52, %p53
      %p55 = scmp.ne.s32.totalorder %s47, %s50
      %p56 = scmp.eq.s32.totalorder %s16, 0
      %p57 = por %p55, %p56
      %p58 = scmp.ne.s32.totalorder %s47, %s50
      %p59 = scmp.eq.s32.totalorder %s21, 3
      %p60 = por %p58, %p59
      %p61 = scmp.ne.s32.totalorder %s50, %s51
      %p62 = scmp.eq.s32.totalorder %s21, 0
      %p63 = por %p61, %p62
      %p64 = scmp.ne.s32.totalorder %s50, %s51
      %p65 = scmp.eq.s32.totalorder %s22, 3
      %p66 = por %p64, %p65
      %p68 = scmp.ne.s32.totalorder %s51, %s67
      %p69 = scmp.eq.s32.totalorder %s22, 0
      %p70 = por %p68, %p69
      %s71 = ssub.s32 %s23, %s42
      %p72 = scmp.eq.s32.totalorder %s71, 0
      %s74 = sadd.s32 %s73, 1
      %s75 = scalar_select %p72, %s73, %s74
      %p78 = pneg %p72
      %p79 = scmp.eq.s32.totalorder %s16, 3
      %p80 = por %p78, %p79
      %p81 = scmp.ne.s32.totalorder %s73, %s76
      %p82 = scmp.eq.s32.totalorder %s16, 0
      %p83 = por %p81, %p82
      %p84 = scmp.ne.s32.totalorder %s73, %s76
      %p85 = scmp.eq.s32.totalorder %s21, 3
      %p86 = por %p84, %p85
      %p87 = scmp.ne.s32.totalorder %s76, %s77
      %p88 = scmp.eq.s32.totalorder %s21, 0
      %p89 = por %p87, %p88
      %p90 = scmp.ne.s32.totalorder %s76, %s77
      %p91 = scmp.eq.s32.totalorder %s22, 3
      %p92 = por %p90, %p91
      %p94 = scmp.ne.s32.totalorder %s77, %s93
      %p95 = scmp.eq.s32.totalorder %s22, 0
      %p96 = por %p94, %p95
      %p97 = scmp.eq.s32.totalorder %s24, 1
      %s98 = scalar_select %p97, 1, 0
      %s99 = smul.u32 %s25, %s98
      %p100 = scmp.eq.s32.totalorder %s38, 1
      %s101 = scalar_select %p100, 1, 0
      %s102 = smul.u32 %s34, %s101
      %s103 = ssub.s32 %s23, %s42
      %s104 = ssub.s32 %s99, %s102
      %s105 = sor.u32 %s103, %s104
      %p106 = scmp.eq.s32.totalorder %s105, 0
      %s108 = sadd.s32 %s107, 1
      %s109 = scalar_select %p106, %s107, %s108
      %p112 = pneg %p106
      %p113 = scmp.eq.s32.totalorder %s16, 3
      %p114 = por %p112, %p113
      %p115 = scmp.ne.s32.totalorder %s107, %s110
      %p116 = scmp.eq.s32.totalorder %s16, 0
      %p117 = por %p115, %p116
      %p118 = scmp.ne.s32.totalorder %s107, %s110
      %p119 = scmp.eq.s32.totalorder %s21, 3
      %p120 = por %p118, %p119
      %p121 = scmp.ne.s32.totalorder %s110, %s111
      %p122 = scmp.eq.s32.totalorder %s21, 0
      %p123 = por %p121, %p122
      %p124 = scmp.ne.s32.totalorder %s110, %s111
      %p125 = scmp.eq.s32.totalorder %s22, 3
      %p126 = por %p124, %p125
      %p128 = scmp.ne.s32.totalorder %s111, %s127
      %p129 = scmp.eq.s32.totalorder %s22, 0
      %p130 = por %p128, %p129
      %s131 = ssub.s32 %s23, %s42
      %p132 = scmp.eq.s32.totalorder %s131, 0
      %s134 = sadd.s32 %s133, 1
      %s135 = scalar_select %p132, %s133, %s134
      %p138 = pneg %p132
      %p139 = scmp.eq.s32.totalorder %s16, 3
      %p140 = por %p138, %p139
      %p141 = scmp.ne.s32.totalorder %s133, %s136
      %p142 = scmp.eq.s32.totalorder %s16, 0
      %p143 = por %p141, %p142
      %p144 = scmp.ne.s32.totalorder %s133, %s136
      %p145 = scmp.eq.s32.totalorder %s21, 3
      %p146 = por %p144, %p145
      %p147 = scmp.ne.s32.totalorder %s136, %s137
      %p148 = scmp.eq.s32.totalorder %s21, 0
      %p149 = por %p147, %p148
      %p150 = scmp.ne.s32.totalorder %s136, %s137
      %p151 = scmp.eq.s32.totalorder %s22, 3
      %p152 = por %p150, %p151
      %p154 = scmp.ne.s32.totalorder %s137, %s153
      %p155 = scmp.eq.s32.totalorder %s22, 0
      %p156 = por %p154, %p155
      %p157 = scmp.le.s32.totalorder 1, %s16
      %p158 = scmp.lt.s32.totalorder %s16, 5
      %p159 = pnand %p157, %p158
      %p160 = pneg %p159
      // Predicated region
      $region9: #{tpu_custom_call.1} parent=5 // pred_check
        _
      $region10: #{tpu_custom_call.1} parent=5 // pred_check_branch
        %162 = sbr.rel (%p159) target = $region12
      $region11: #{tpu_custom_call.1} parent=5 // pred_region
        %s163 = ssub.s32 %s16, 1
      $region12: #{tpu_custom_call.1} parent=5 // pred_fallthru
        _
      %p164 = scmp.lt.s32.totalorder %s16, 4
      // Predicated region
      $region13: #{tpu_custom_call.1} parent=5 // pred_check
        %p165 = pneg %p164
      $region14: #{tpu_custom_call.1} parent=5 // pred_check_branch
        %167 = sbr.rel (%p165) target = $region16
      $region15: #{tpu_custom_call.1} parent=5 // pred_region
        // Predicated region
        $region17: #{tpu_custom_call.1} parent=15 // pred_check
          %p168 = pneg %p57
        $region18: #{tpu_custom_call.1} parent=15 // pred_check_branch
          %170 = sbr.rel (%p168) target = $region20
        $region19: #{tpu_custom_call.1} parent=15 // pred_region
          %s171 = smul.u32 2, %s25
          %p172 = scmp.lt.s32.totalorder %s23, 1
          %s173 = scalar_select %p172, %s23, 1
          %p174 = scmp.lt.s32.totalorder %s171, 1
          %s175 = scalar_select %p174, %s171, 1
          %s176 = smul.addr %s173, 2
          %s177 = sadd.s32 %s175, %s176
          %s178 = smul.addr %s177, 8
          %s179 = scalar_lea.vmem %s0, %s178
          %s180 = smul.u32 2, %s25
        $region20: #{tpu_custom_call.1} parent=15 // pred_fallthru
          _
        // Predicated region
        $region21: #{tpu_custom_call.1} parent=15 // pred_check
          %p181 = pneg %p83
        $region22: #{tpu_custom_call.1} parent=15 // pred_check_branch
          %183 = sbr.rel (%p181) target = $region24
        $region23: #{tpu_custom_call.1} parent=15 // pred_region
          %p184 = scmp.lt.s32.totalorder %s23, 1
          %s185 = scalar_select %p184, %s23, 1
          %s186 = smul.addr %s185, 4
          %s187 = scalar_lea.vmem %s1, %s186
        $region24: #{tpu_custom_call.1} parent=15 // pred_fallthru
          _
      $region16: #{tpu_custom_call.1} parent=5 // pred_fallthru
        _
      %p188 = scmp.le.s32.totalorder 1, %s16
      %p189 = scmp.lt.s32.totalorder %s16, 5
      %p190 = pnand %p188, %p189
      %p191 = pneg %p190
      // Predicated region
      $region25: #{tpu_custom_call.1} parent=5 // pred_check
        _
      $region26: #{tpu_custom_call.1} parent=5 // pred_check_branch
        %193 = sbr.rel (%p190) target = $region28
      $region27: #{tpu_custom_call.1} parent=5 // pred_region
        %s194 = ssub.s32 %s16, 1
        %s195 = smul.u32 2, %s28
        %p196 = scmp.lt.s32.totalorder %s26, 1
        %s197 = scalar_select %p196, %s26, 1
        %p198 = scmp.lt.s32.totalorder %s195, 1
        %s199 = scalar_select %p198, %s195, 1
        %s200 = smul.addr %s197, 2
        %s201 = sadd.s32 %s199, %s200
        %s202 = smul.addr %s201, 8
        %s203 = scalar_lea.vmem %s0, %s202
        %p204 = pneg %p63
        %p205 = pneg %p60
        %p206 = scmp.lt.s32.totalorder %s26, 1
        %s207 = scalar_select %p206, %s26, 1
        %s208 = smul.addr %s207, 4
        %s209 = scalar_lea.vmem %s1, %s208
        %p210 = pneg %p89
        %p211 = pneg %p86
        %p212 = pneg %p123
        %p213 = pneg %p120
        %s214 = sand.u32 %s110, 1
        %s215 = scalar_lea.sflag [#allocation6], %s214
        %s216 = sand.u32 %s110, 1
        %s217 = smul.addr %s216, 8
        %s218 = scalar_lea.vmem [#allocation5], %s217
        %p219 = pneg %p149
        %p220 = pneg %p146
        %s221 = sand.u32 %s136, 1
        %s222 = scalar_lea.sflag [#allocation8], %s221
        %s223 = sand.u32 %s136, 1
        %s224 = smul.addr %s223, 4
        %s225 = scalar_lea.vmem [#allocation7], %s224
        %s226 = smul.u32 2, %s28
        %p227 = scmp.lt.s32.totalorder %s26, 1
        %s228 = scalar_select %p227, %s26, 1
        %p229 = scmp.lt.s32.totalorder %s226, 1
        %s230 = scalar_select %p229, %s226, 1
        %s231 = smul.addr %s228, 2
        %s232 = sadd.s32 %s230, %s231
        %s233 = smul.addr %s232, 8
        %s234 = scalar_lea.vmem %s0, %s233
        %s235 = smul.u32 2, %s28
        %p236 = scmp.lt.s32.totalorder %s26, 1
        %s237 = scalar_select %p236, %s26, 1
        %s238 = smul.addr %s237, 4
        %s239 = scalar_lea.vmem %s1, %s238
        %p240 = scmp.eq.s32.totalorder %s27, 1
        %s241 = scalar_select %p240, 1, 0
        %s242 = smul.u32 %s28, %s241
        %s243 = smul.u32 2, %s242
        %p244 = scmp.eq.s32.totalorder %s27, 0
        %p245 = scmp.eq.s32.totalorder %s28, 0
        %p246 = pnand %p244, %p245
        %p247 = pneg %p246
        // Predicated region
        $region29: #{tpu_custom_call.1} parent=27 // pred_check
          _
        $region30: #{tpu_custom_call.1} parent=27 // pred_check_branch
          %249 = sbr.rel (%p246) target = $region32
        $region31: #{tpu_custom_call.1} parent=27 // pred_region
          %v250 = vld [vmem:[%s239] sm:$0xf]
          %vm251 = vcmask 44032
          %252 = vst.msk [vmem:[#allocation2] sm:$0xf] %vm251, %v250
        $region32: #{tpu_custom_call.1} parent=27 // pred_fallthru
          _
        // Predicated region
        $region33: #{tpu_custom_call.1} parent=27 // pred_check
          %p253 = pneg %p245
        $region34: #{tpu_custom_call.1} parent=27 // pred_check_branch
          %255 = sbr.rel (%p253) target = $region36
        $region35: #{tpu_custom_call.1} parent=27 // pred_region
          %vm256 = vcmask 44032
          %257 = vst.msk [vmem:[#allocation3] sm:$0xf] %vm256, 0.0
          %vm258 = vcmask 3072
          %259 = vst.msk [vmem:[#allocation4] sm:$0xf] %vm258, 0.0
        $region36: #{tpu_custom_call.1} parent=27 // pred_fallthru
          _
        %v260 = vld [vmem:[%s234] sm:$0x3f]
        %v261 = vld [vmem:[%s234 + $0x8] sm:$0x3f]
        %v262 = vld [vmem:[#allocation2] sm:$0xf]
        %v263 = vmul.f32 %v262, 2.0
        %vm264 = vcmask 48128
        %v266 = vsel %vm264, %v263, 0
        %vm268 = vcmask 1045504
        %v270 = vsel %vm268, %v260, 0
        %v273 = vsel %vm268, %v261, 0
        %275 = vmatprep.subr.mxu0 %v273
        %276 = vmatpush1.msra.mxu0 %v270
        %277 = vmatprep.subr.mxu0 0.0
        %278 = vmatpush1.msra.mxu0 0.0
        %279 = vmatprep.subr.mxu0 0.0
        %280 = vmatpush1.msra.mxu0 0.0
        %281 = vmatprep.subr.mxu0 0.0
        %282 = vmatpush1.msra.mxu0 0.0
        %283 = vmatprep.subr.mxu0 0.0
        %284 = vmatpush1.msra.mxu0 0.0
        %285 = vmatprep.subr.mxu0 0.0
        %286 = vmatpush1.msra.mxu0 0.0
        %287 = vmatprep.subr.mxu0 0.0
        %288 = vmatpush1.msra.mxu0 0.0
        %289 = vmatprep.subr.mxu0 0.0
        %290 = vmatpush1.msra.mxu0 0.0
        %291 = vmatprep.subr.mxu0 0.0
        %292 = vmatpush1.msra.mxu0 0.0
        %293 = vmatprep.subr.mxu0 0.0
        %294 = vmatpush1.msra.mxu0 0.0
        %295 = vmatprep.subr.mxu0 0.0
        %296 = vmatpush1.msra.mxu0 0.0
        %297 = vmatprep.subr.mxu0 0.0
        %298 = vmatpush1.msra.mxu0 0.0
        %299 = vmatprep.subr.mxu0 0.0
        %300 = vmatpush1.msra.mxu0 0.0
        %301 = vmatprep.subr.mxu0 0.0
        %302 = vmatpush1.msra.mxu0 0.0
        %303 = vmatprep.subr.mxu0 0.0
        %304 = vmatpush1.msra.mxu0 0.0
        %305 = vmatprep.subr.mxu0 0.0
        %306 = vmatpush1.msra.mxu0 0.0
        %307 = vmatprep.subr.mxu0 0.0
        %308 = vmatpush1.msra.mxu0 0.0
        %309 = vmatprep.subr.mxu0 0.0
        %310 = vmatpush1.msra.mxu0 0.0
        %311 = vmatprep.subr.mxu0 0.0
        %312 = vmatpush1.msra.mxu0 0.0
        %313 = vmatprep.subr.mxu0 0.0
        %314 = vmatpush1.msra.mxu0 0.0
        %315 = vmatprep.subr.mxu0 0.0
        %316 = vmatpush1.msra.mxu0 0.0
        %317 = vmatprep.subr.mxu0 0.0
        %318 = vmatpush1.msra.mxu0 0.0
        %319 = vmatprep.subr.mxu0 0.0
        %320 = vmatpush1.msra.mxu0 0.0
        %321 = vmatprep.subr.mxu0 0.0
        %322 = vmatpush1.msra.mxu0 0.0
        %323 = vmatprep.subr.mxu0 0.0
        %324 = vmatpush1.msra.mxu0 0.0
        %325 = vmatprep.subr.mxu0 0.0
        %326 = vmatpush1.msra.mxu0 0.0
        %327 = vmatprep.subr.mxu0 0.0
        %328 = vmatpush1.msra.mxu0 0.0
        %329 = vmatprep.subr.mxu0 0.0
        %330 = vmatpush1.msra.mxu0 0.0
        %331 = vmatprep.subr.mxu0 0.0
        %332 = vmatpush1.msra.mxu0 0.0
        %333 = vmatprep.subr.mxu0 0.0
        %334 = vmatpush1.msra.mxu0 0.0
        %335 = vmatprep.subr.mxu0 0.0
        %336 = vmatpush1.msra.mxu0 0.0
        %337 = vmatprep.subr.mxu0 0.0
        %338 = vmatpush1.msra.mxu0 0.0
        %339 = vmatprep.mubr.f32.mxu0 0.0
        %340 = vmatmul.mubr.f32.gmra.mrb[0].mxu0 %v266
        %v341 = vpop.f32.mrb[0].mxu0
        %v342 = vadd.f32 0.0, %v341
        %v343 = vpop.f32.mrb[0].mxu0
        %v344 = vadd.f32 0.0, %v343
        %345 = vdwg.mxu0
        %v346 = vmul.f32 %v262, %v262
        %vm347 = vcmask 44032
        %v348 = vsel %vm347, %v346, 0.0
        %349 = vadd.xlane.f32.xlu0 %v348
        %v350 = vpop.xlane.xlu0 %349
        %v351 = vsub.f32 %v342, %v350
        %v352 = vsub.f32 %v344, %v350
        %vm353 = vcmask 1043456
        %v354 = vsel %vm353, %v351, -inf
        %v355 = vrot.slane %v354, 4
        %v356 = vmax.f32 %v354, %v355
        %v357 = vrot.slane %v356, 2
        %v358 = vmax.f32 %v356, %v357
        %v359 = vrot.slane %v358, 1
        %v360 = vmax.f32 %v358, %v359
        %v361 = vsel %vm353, %v352, -inf
        %v362 = vrot.slane %v361, 4
        %v363 = vmax.f32 %v361, %v362
        %v364 = vrot.slane %v363, 2
        %v365 = vmax.f32 %v363, %v364
        %v366 = vrot.slane %v365, 1
        %v367 = vmax.f32 %v365, %v366
        %v368 = vsub.f32 %v351, %v360
        %v369 = vsub.f32 %v352, %v367
        %v370 = vmul.f32 %v368, 1.442695
        %v371 = vpow.pop %v370
        %v372 = vmul.f32 %v369, 1.442695
        %v373 = vpow.pop %v372
        %v374 = vsel %vm353, %v371, 0.0
        %v375 = vrot.slane %v374, 4
        %v376 = vadd.f32 %v374, %v375
        %v377 = vrot.slane %v376, 2
        %v378 = vadd.f32 %v376, %v377
        %v379 = vrot.slane %v378, 1
        %v380 = vadd.f32 %v378, %v379
        %v381 = vsel %vm353, %v373, 0.0
        %v382 = vrot.slane %v381, 4
        %v383 = vadd.f32 %v381, %v382
        %v384 = vrot.slane %v383, 2
        %v385 = vadd.f32 %v383, %v384
        %v386 = vrot.slane %v385, 1
        %v387 = vadd.f32 %v385, %v386
        %v388 = vrcp.pop %v380
        %v389 = vmul.f32 1.0, %v388
        %v390 = vrcp.pop %v387
        %v391 = vmul.f32 1.0, %v390
        %v392 = vmul.f32 %v371, %v389
        %v393 = vmul.f32 %v373, %v391
        %v394 = vld [vmem:[#allocation3] sm:$0xf]
        %395 = vmatprep.subr.mxu0 %v261
        %396 = vmatpush1.xpose.msra.mxu0 %v260
        %397 = vmatprep.subr.mxu0 0.0
        %398 = vmatpush1.xpose.msra.mxu0 0.0
        %399 = vmatprep.subr.mxu0 0.0
        %400 = vmatpush1.xpose.msra.mxu0 0.0
        %401 = vmatprep.subr.mxu0 0.0
        %402 = vmatpush1.xpose.msra.mxu0 0.0
        %403 = vmatprep.subr.mxu0 0.0
        %404 = vmatpush1.xpose.msra.mxu0 0.0
        %405 = vmatprep.subr.mxu0 0.0
        %406 = vmatpush1.xpose.msra.mxu0 0.0
        %407 = vmatprep.subr.mxu0 0.0
        %408 = vmatpush1.xpose.msra.mxu0 0.0
        %409 = vmatprep.subr.mxu0 0.0
        %410 = vmatpush1.xpose.msra.mxu0 0.0
        %411 = vmatprep.subr.mxu0 0.0
        %412 = vmatpush1.xpose.msra.mxu0 0.0
        %413 = vmatprep.subr.mxu0 0.0
        %414 = vmatpush1.xpose.msra.mxu0 0.0
        %415 = vmatprep.subr.mxu0 0.0
        %416 = vmatpush1.xpose.msra.mxu0 0.0
        %417 = vmatprep.subr.mxu0 0.0
        %418 = vmatpush1.xpose.msra.mxu0 0.0
        %419 = vmatprep.subr.mxu0 0.0
        %420 = vmatpush1.xpose.msra.mxu0 0.0
        %421 = vmatprep.subr.mxu0 0.0
        %422 = vmatpush1.xpose.msra.mxu0 0.0
        %423 = vmatprep.subr.mxu0 0.0
        %424 = vmatpush1.xpose.msra.mxu0 0.0
        %425 = vmatprep.subr.mxu0 0.0
        %426 = vmatpush1.xpose.msra.mxu0 0.0
        %427 = vmatprep.subr.mxu0 0.0
        %428 = vmatpush1.xpose.msra.mxu0 0.0
        %429 = vmatprep.subr.mxu0 0.0
        %430 = vmatpush1.xpose.msra.mxu0 0.0
        %431 = vmatprep.subr.mxu0 0.0
        %432 = vmatpush1.xpose.msra.mxu0 0.0
        %433 = vmatprep.subr.mxu0 0.0
        %434 = vmatpush1.xpose.msra.mxu0 0.0
        %435 = vmatprep.subr.mxu0 0.0
        %436 = vmatpush1.xpose.msra.mxu0 0.0
        %437 = vmatprep.subr.mxu0 0.0
        %438 = vmatpush1.xpose.msra.mxu0 0.0
        %439 = vmatprep.subr.mxu0 0.0
        %440 = vmatpush1.xpose.msra.mxu0 0.0
        %441 = vmatprep.subr.mxu0 0.0
        %442 = vmatpush1.xpose.msra.mxu0 0.0
        %443 = vmatprep.subr.mxu0 0.0
        %444 = vmatpush1.xpose.msra.mxu0 0.0
        %445 = vmatprep.subr.mxu0 0.0
        %446 = vmatpush1.xpose.msra.mxu0 0.0
        %447 = vmatprep.subr.mxu0 0.0
        %448 = vmatpush1.xpose.msra.mxu0 0.0
        %449 = vmatprep.subr.mxu0 0.0
        %450 = vmatpush1.xpose.msra.mxu0 0.0
        %451 = vmatprep.subr.mxu0 0.0
        %452 = vmatpush1.xpose.msra.mxu0 0.0
        %453 = vmatprep.subr.mxu0 0.0
        %454 = vmatpush1.xpose.msra.mxu0 0.0
        %455 = vmatprep.subr.mxu0 0.0
        %456 = vmatpush1.xpose.msra.mxu0 0.0
        %457 = vmatprep.subr.mxu0 0.0
        %458 = vmatpush1.xpose.msra.mxu0 0.0
        %459 = vmatprep.mubr.f32.mxu0 %v393
        %460 = vmatmul.mubr.f32.gmra.mrb[0].mxu0 %v392
        %v461 = vpop.f32.mrb[0].mxu0
        %v462 = vadd.f32 0.0, %v461
        %v463 = vpop.f32.mrb[0].mxu0
        %464 = vdwg.mxu0
        %v465 = vadd.f32 %v394, %v462
        %466 = vst.msk [vmem:[#allocation3] sm:$0xf] %vm347, %v465
        %v467 = vld [vmem:[#allocation4] sm:$0xf]
        %v468 = vsel %vm353, %v392, 0.0
        %v469 = vsel %vm353, %v393, 0.0
        %v470 = vadd.f32 %v468, %v469
        %471 = vadd.xlane.f32.xlu0 %v470
        %v472 = vpop.xlane.xlu0 %471
        %v473 = vadd.f32 %v467, %v472
        %vm474 = vcmask 3072
        %475 = vst.msk [vmem:[#allocation4] sm:$0xf] %vm474, %v473
        %p476 = scmp.eq.s32.totalorder %s27, 1
        // Predicated region
        $region37: #{tpu_custom_call.1} parent=27 // pred_check
          %p477 = pneg %p476
        $region38: #{tpu_custom_call.1} parent=27 // pred_check_branch
          %479 = sbr.rel (%p477) target = $region40
        $region39: #{tpu_custom_call.1} parent=27 // pred_region
          %v482 = vcombine.low %v392, %v393
          %484 = vst [vmem:[%s218] sm:$0xff] %v482
        $region40: #{tpu_custom_call.1} parent=27 // pred_fallthru
          _
        // Predicated region
        $region41: #{tpu_custom_call.1} parent=27 // pred_check
          %p485 = pneg %p245
        $region42: #{tpu_custom_call.1} parent=27 // pred_check_branch
          %487 = sbr.rel (%p485) target = $region44
        $region43: #{tpu_custom_call.1} parent=27 // pred_region
          %v488 = vld [vmem:[#allocation3] sm:$0xf]
          %v489 = vld [vmem:[#allocation4] sm:$0xf]
          %491 = vset.pattern.permute.xlu0 0
          %492 = vperm.xlu0 %491, %v489
          %v493 = vpop.permute.xlu0 %492
          %v495 = vrcp.pop %v493
          %v496 = vmul.f32 %v488, %v495
          %497 = vst.msk [vmem:[#allocation2] sm:$0xf] %vm347, %v496
        $region44: #{tpu_custom_call.1} parent=27 // pred_fallthru
          _
        %p498 = pnand %p476, %p245
        %p499 = pneg %p498
        // Predicated region
        $region45: #{tpu_custom_call.1} parent=27 // pred_check
          _
        $region46: #{tpu_custom_call.1} parent=27 // pred_check_branch
          %501 = sbr.rel (%p498) target = $region48
        $region47: #{tpu_custom_call.1} parent=27 // pred_region
          %v502 = vld [vmem:[#allocation2] sm:$0xf]
          %503 = vst.msk [vmem:[%s225] sm:$0xf] %vm347, %v502
        $region48: #{tpu_custom_call.1} parent=27 // pred_fallthru
          _
        %s504 = sand.u32 %s110, 1
        %s505 = scalar_lea.sflag [#allocation6], %s504
        %s506 = sand.u32 %s110, 1
        %s507 = smul.addr %s506, 8
        %s508 = scalar_lea.vmem [#allocation5], %s507
        %s509 = sand.u32 %s136, 1
        %s510 = scalar_lea.sflag [#allocation8], %s509
        %s511 = sand.u32 %s136, 1
        %s512 = smul.addr %s511, 4
        %s513 = scalar_lea.vmem [#allocation7], %s512
        // Predicated region
        $region49: #{tpu_custom_call.1} parent=27 // pred_check
          %p514 = pneg %p120
        $region50: #{tpu_custom_call.1} parent=27 // pred_check_branch
          %516 = sbr.rel (%p514) target = $region52
        $region51: #{tpu_custom_call.1} parent=27 // pred_region
          %p517 = scmp.eq.s32.totalorder %s27, 1
          %s518 = scalar_select %p517, 1, 0
          %s519 = smul.u32 %s28, %s518
          %s520 = smul.u32 2, %s519
          %s522 = ssub.s32 128, 128
          %523 = vsyncadd %s505, %s522
          %s524 = smul.addr %s26, 2
          %s525 = sadd.s32 %s520, %s524
          %s526 = smul.addr %s525, 64
          %s527 = scalar_lea.hbm %s2, %s526
          %s529 = sshll.u32 %s508, 4
          %s530 = int_to_ptr.vmem [resolvable:$true] %s529
          %532 = dma.vmem_to_hbm [thread:$0]  %s530, 128, %s527, %s505
        $region52: #{tpu_custom_call.1} parent=27 // pred_fallthru
          _
        // Predicated region
        $region53: #{tpu_custom_call.1} parent=27 // pred_check
          %p533 = pneg %p146
        $region54: #{tpu_custom_call.1} parent=27 // pred_check_branch
          %535 = sbr.rel (%p533) target = $region56
        $region55: #{tpu_custom_call.1} parent=27 // pred_region
          %s537 = ssub.s32 64, 64
          %538 = vsyncadd %s510, %s537
          %s539 = smul.addr %s26, 64
          %s540 = scalar_lea.hbm %s3, %s539
          %s542 = sshll.u32 %s513, 4
          %s543 = int_to_ptr.vmem [resolvable:$true] %s542
          %545 = dma.vmem_to_hbm [thread:$0]  %s543, 64, %s540, %s510
        $region56: #{tpu_custom_call.1} parent=27 // pred_fallthru
          _
      $region28: #{tpu_custom_call.1} parent=5 // pred_fallthru
        _
      %p546 = scmp.le.s32.totalorder 2, %s16
      // Predicated region
      $region57: #{tpu_custom_call.1} parent=5 // pred_check
        %p547 = pneg %p546
      $region58: #{tpu_custom_call.1} parent=5 // pred_check_branch
        %549 = sbr.rel (%p547) target = $region60
      $region59: #{tpu_custom_call.1} parent=5 // pred_region
        %s550 = ssub.s32 %s16, 2
        // Predicated region
        $region61: #{tpu_custom_call.1} parent=59 // pred_check
          %p551 = pneg %p126
        $region62: #{tpu_custom_call.1} parent=59 // pred_check_branch
          %553 = sbr.rel (%p551) target = $region64
        $region63: #{tpu_custom_call.1} parent=59 // pred_region
          %s554 = sand.u32 %s111, 1
          %s555 = scalar_lea.sflag [#allocation6], %s554
          %s556 = sand.u32 %s111, 1
          %s557 = smul.addr %s556, 8
          %s558 = scalar_lea.vmem [#allocation5], %s557
          %559 = dma.done %s555, 128
        $region64: #{tpu_custom_call.1} parent=59 // pred_fallthru
          _
        // Predicated region
        $region65: #{tpu_custom_call.1} parent=59 // pred_check
          %p560 = pneg %p152
        $region66: #{tpu_custom_call.1} parent=59 // pred_check_branch
          %562 = sbr.rel (%p560) target = $region68
        $region67: #{tpu_custom_call.1} parent=59 // pred_region
          %s563 = sand.u32 %s137, 1
          %s564 = scalar_lea.sflag [#allocation8], %s563
          %s565 = sand.u32 %s137, 1
          %s566 = smul.addr %s565, 4
          %s567 = scalar_lea.vmem [#allocation7], %s566
          %568 = dma.done %s564, 64
        $region68: #{tpu_custom_call.1} parent=59 // pred_fallthru
          _
      $region60: #{tpu_custom_call.1} parent=5 // pred_fallthru
        _
    $region6: #{tpu_custom_call.1} parent=1 // loop_footer
      %s20 = sadd.s32 1, %s16
    $region7: #{tpu_custom_call.1} parent=1 // loop_footer_branch
      %15 = sbr.rel target = $region3
    $region8: #{tpu_custom_call.1} parent=1 // loop_exit
      _
    %569 = vsyncpa [#allocation6], 1
    %s570 = scalar_lea.sflag [#allocation6], 1
    %571 = vsyncpa %s570, 1
    %572 = vsyncpa [#allocation8], 1
    %s573 = scalar_lea.sflag [#allocation8], 1
    %574 = vsyncpa %s573, 1

</llo_original>
